<compile_context>
chip_gen: v6e
topology: v6e:2x2x1
jax: 0.10.0
libtpu: 0.0.40
codegen_flags: <defaults>
</compile_context>

<pallas_src>
import functools

import jax
import jax.numpy as jnp
from jax.experimental import pallas as pl
from jax.experimental.pallas import tpu as pltpu


def _round_up(x, m):
    return (x + m - 1) // m * m


def _focal_kernel(*refs, gamma, ignore_index, n_rows, tile_n, has_alpha):
    if has_alpha:
        logits_ref, targets_ref, alpha_ref, out_ref = refs
    else:
        logits_ref, targets_ref, out_ref = refs
        alpha_ref = None

    i = pl.program_id(0)

    x = logits_ref[...].astype(jnp.float32)        # (TN, C)
    t = targets_ref[...]                           # (TN, 1) int32

    # Row validity: inside the real batch (ragged last tile) and not ignored.
    row = i * tile_n + jax.lax.broadcasted_iota(jnp.int32, t.shape, 0)   # (TN,1)
    valid = jnp.logical_and(row < n_rows, t != ignore_index)             # (TN,1)

    # --- cross entropy (reduction='none'): ce = logsumexp(x) - x[target] ---
    # Fused so the full (TN, C) log-prob matrix is never materialized.
    m = jnp.max(x, axis=-1, keepdims=True)
    z = x - m
    e = jnp.exp(z)
    s = jnp.sum(e, axis=-1, keepdims=True)

    cls = jax.lax.broadcasted_iota(jnp.int32, x.shape, 1)
    hit = cls == t                                 # (TN, C) bool one-hot mask

    z_t = jnp.sum(jnp.where(hit, z, 0.0), axis=-1, keepdims=True)        # z[target]
    ce = jnp.log(s) - z_t                          # (TN, 1)

    # --- focal weighting (matches the PyTorch module, incl. its sign) ---
    pt = jnp.exp(-ce)
    if has_alpha:
        a = alpha_ref[...].astype(jnp.float32)     # (1, C)
        at = jnp.sum(jnp.where(hit, a, 0.0), axis=-1, keepdims=True)     # alpha.gather
        logpt = ce * at
    else:
        logpt = ce

    omp = 1.0 - pt
    g = float(gamma)
    if g == int(g) and 0 <= int(g) <= 8:
        # integer gamma: repeated multiplies (no EUP pow, no 0**0 NaN edge)
        w = jnp.ones_like(omp)
        for _ in range(int(g)):
            w = w * omp
    else:
        w = omp ** g

    fl = jnp.where(valid, -w * logpt, 0.0)         # (TN, 1); masked rows -> 0

    # Per-tile partial sum; final reduce + /denom happen in the wrapper.
    out_ref[...] = jnp.sum(fl).reshape(1, 1, 1)


def focal_loss_pallas(logits, targets, alpha=None, gamma=2.0, ignore_index=-1,
                      reduction="mean", tile_n=1024):
    """Pallas TPU implementation of FocalLoss.forward.

    logits:  (N, C) float32 or bfloat16
    targets: (N,)   int (class ids; `ignore_index` entries contribute 0 loss
             but still count in the 'mean' denominator, matching the module).
    """
    N, C = logits.shape
    has_alpha = alpha is not None

    # --- per-class alpha weights (mirrors the module's __init__ paths) ---
    if has_alpha:
        if isinstance(alpha, (float, int)) and not isinstance(alpha, bool):
            alpha_vec = jnp.asarray([alpha, 1.0 - alpha], jnp.float32)
        else:
            alpha_vec = jnp.asarray(alpha, jnp.float32)
        alpha_vec = alpha_vec.reshape(1, C)

    t2 = targets.astype(jnp.int32).reshape(N, 1)

    if reduction == "mean":
        denom = float(N)
    elif reduction == "sum":
        denom = 1.0
    else:
        # TODO(synk): reduction='none' (per-element output) not wired up here.
        raise NotImplementedError("only 'mean' and 'sum' reductions implemented")

    # --- tile sizing: large batch tiles, budgeted to be safe on v5e/v6e/v7x ---
    VMEM_BUDGET = 16 * 1024 * 1024                 # well under v7x's 64 MiB physical
    in_itemsize = jnp.dtype(logits.dtype).itemsize
    # 2x double-buffered logits tile + ~6 f32 (TN,C) temporaries + targets.
    bytes_per_row = C * (2 * in_itemsize + 6 * 4) + 2 * 8
    cap = max(16, (VMEM_BUDGET // bytes_per_row) // 16 * 16)
    tn = max(16, min(int(tile_n), cap))
    tn = min(tn, _round_up(N, 16))                 # don't over-tile tiny batches
    tn = _round_up(tn, 16)                         # keep (8/16,128)-friendly blocks
    tiles = -(-N // tn)

    kernel = functools.partial(
        _focal_kernel, gamma=float(gamma), ignore_index=int(ignore_index),
        n_rows=int(N), tile_n=int(tn), has_alpha=has_alpha)

    in_specs = [
        pl.BlockSpec((tn, C), lambda i: (i, 0)),   # logits tile
        pl.BlockSpec((tn, 1), lambda i: (i, 0)),   # targets tile
    ]
    inputs = [logits, t2]
    if has_alpha:
        in_specs.append(pl.BlockSpec((1, C), lambda i: (0, 0)))  # alpha (resident)
        inputs.append(alpha_vec)

    partials = pl.pallas_call(
        kernel,
        out_shape=jax.ShapeDtypeStruct((tiles, 1, 1), jnp.float32),
        grid_spec=pltpu.PrefetchScalarGridSpec(
            num_scalar_prefetch=0,
            grid=(tiles,),
            in_specs=in_specs,
            out_specs=pl.BlockSpec((1, 1, 1), lambda i: (i, 0, 0)),
            scratch_shapes=[],
        ),
        compiler_params=pltpu.CompilerParams(
            dimension_semantics=("parallel",),     # independent tiles: megacore-OK
            vmem_limit_bytes=32 * 1024 * 1024,     # raise v5e's 16 MiB scoped default
        ),
    )(*inputs)

    return jnp.sum(partials) / denom


def _focal_loss_ref(logits, targets, alpha=None, gamma=2.0, ignore_index=-1,
                    reduction="mean"):
    """Pure-JAX reference mirroring the PyTorch module."""
    logp = jax.nn.log_softmax(logits.astype(jnp.float32), axis=-1)
    valid = (targets != ignore_index)
    safe_t = jnp.where(valid, targets, 0)
    ce = -jnp.take_along_axis(logp, safe_t[:, None], axis=-1)[:, 0]
    ce = jnp.where(valid, ce, 0.0)
    pt = jnp.exp(-ce)
    if alpha is not None:
        if isinstance(alpha, (float, int)) and not isinstance(alpha, bool):
            avec = jnp.asarray([alpha, 1.0 - alpha], jnp.float32)
        else:
            avec = jnp.asarray(alpha, jnp.float32)
        at = avec[safe_t]
        at = jnp.where(valid, at, 0.0)
        logpt = ce * at
    else:
        logpt = ce
    fl = -((1.0 - pt) ** gamma) * logpt
    if reduction == "mean":
        return jnp.mean(fl)
    elif reduction == "sum":
        return jnp.sum(fl)
    return fl


if __name__ == "__main__":
    key = jax.random.PRNGKey(0)
    N, C = 300, 16                       # ragged N exercises the masked last tile
    k1, k2 = jax.random.split(key)

    logits = jax.random.normal(k1, (N, C), jnp.float32)
    targets = jax.random.randint(k2, (N,), 0, C)

    # Case 1: default module config (alpha=None, gamma=2.0, reduction='mean'),
    # with some ignore_index entries sprinkled in.
    targets_ign = targets.at[::17].set(-1)
    out1 = jax.block_until_ready(focal_loss_pallas(logits, targets_ign))
    ref1 = _focal_loss_ref(logits, targets_ign)
    assert jnp.allclose(out1, ref1, rtol=1e-5, atol=1e-5), (out1, ref1)

    # Case 2: per-class alpha weights (list init path), sum reduction.
    alpha = [0.5 + 0.03 * i for i in range(C)]
    out2 = jax.block_until_ready(
        focal_loss_pallas(logits, targets, alpha=alpha, reduction="sum"))
    ref2 = _focal_loss_ref(logits, targets, alpha=alpha, reduction="sum")
    assert jnp.allclose(out2, ref2, rtol=1e-5, atol=1e-4), (out2, ref2)

    # Case 3: bf16 logits (bandwidth saver on v5e/v6e) + non-integer gamma path.
    logits_bf = logits.astype(jnp.bfloat16)
    out3 = jax.block_until_ready(
        focal_loss_pallas(logits_bf, targets_ign, gamma=1.5))
    ref3 = _focal_loss_ref(logits_bf.astype(jnp.float32), targets_ign, gamma=1.5)
    assert jnp.allclose(out3, ref3, rtol=1e-4, atol=1e-4), (out3, ref3)

    print("KERNEL_OK")
</pallas_src>

<mosaic_0001>
module attributes {stable_mosaic.version = 11 : i64} {
  func.func @_focal_kernel(%arg0: i32, %arg1: memref<304x16xf32, #tpu.memory_space<vmem>>, %arg2: memref<304x1xi32, #tpu.memory_space<vmem>>, %arg3: memref<1x1x1xf32, #tpu.memory_space<vmem>>) attributes {dimension_semantics = [#tpu.dimension_semantics<parallel>], iteration_bounds = array<i64: 1>, scalar_prefetch = 0 : i64, scratch_operands = 0 : i64, tpu.core_type = #tpu.core_type<tc>, window_params = [{transform_indices = @transform_0, window_bounds = array<i64: 304, 16>}, {transform_indices = @transform_1, window_bounds = array<i64: 304, 1>}, {transform_indices = @transform_2, window_bounds = array<i64: 1, 1, 1>}]} {
    %c0 = arith.constant 0 : index
    %c0_0 = arith.constant 0 : index
    %0 = vector.load %arg1[%c0, %c0_0] : memref<304x16xf32, #tpu.memory_space<vmem>>, vector<304x16xf32>
    %c0_1 = arith.constant 0 : index
    %c0_2 = arith.constant 0 : index
    %1 = vector.load %arg2[%c0_1, %c0_2] : memref<304x1xi32, #tpu.memory_space<vmem>>, vector<304x1xi32>
    %c304_i32 = arith.constant 304 : i32
    %2 = arith.muli %arg0, %c304_i32 : i32
    %3 = tpu.iota {dimensions = array<i32: 0>} : vector<304x1xi32>
    %4 = vector.broadcast %2 : i32 to vector<304x1xi32>
    %5 = arith.addi %4, %3 : vector<304x1xi32>
    %c300_i32 = arith.constant 300 : i32
    %6 = vector.broadcast %c300_i32 : i32 to vector<304x1xi32>
    %7 = arith.cmpi slt, %5, %6 : vector<304x1xi32>
    %c-1_i32 = arith.constant -1 : i32
    %8 = vector.broadcast %c-1_i32 : i32 to vector<304x1xi32>
    %9 = arith.cmpi ne, %1, %8 : vector<304x1xi32>
    %10 = arith.andi %7, %9 : vector<304x1xi1>
    %cst = arith.constant dense<0xFF800000> : vector<304xf32>
    %11 = vector.multi_reduction <maximumf>, %0, %cst [1] : vector<304x16xf32> to vector<304xf32>
    %12 = vector.shape_cast %11 : vector<304xf32> to vector<304x1xf32>
    %13 = vector.broadcast %12 : vector<304x1xf32> to vector<304x16xf32>
    %14 = arith.subf %0, %13 : vector<304x16xf32>
    %15 = math.exp %14 : vector<304x16xf32>
    %cst_3 = arith.constant dense<0.000000e+00> : vector<304xf32>
    %16 = vector.multi_reduction <add>, %15, %cst_3 [1] : vector<304x16xf32> to vector<304xf32>
    %17 = vector.shape_cast %16 : vector<304xf32> to vector<304x1xf32>
    %18 = tpu.iota {dimensions = array<i32: 1>} : vector<304x16xi32>
    %19 = vector.broadcast %1 : vector<304x1xi32> to vector<304x16xi32>
    %20 = arith.cmpi eq, %18, %19 : vector<304x16xi32>
    %cst_4 = arith.constant 0.000000e+00 : f32
    %21 = vector.broadcast %cst_4 : f32 to vector<304x16xf32>
    %22 = arith.select %20, %14, %21 : vector<304x16xi1>, vector<304x16xf32>
    %cst_5 = arith.constant dense<0.000000e+00> : vector<304xf32>
    %23 = vector.multi_reduction <add>, %22, %cst_5 [1] : vector<304x16xf32> to vector<304xf32>
    %24 = vector.shape_cast %23 : vector<304xf32> to vector<304x1xf32>
    %25 = math.log %17 : vector<304x1xf32>
    %26 = arith.subf %25, %24 : vector<304x1xf32>
    %cst_6 = arith.constant 0.000000e+00 : f32
    %27 = vector.broadcast %cst_6 : f32 to vector<304x1xf32>
    %28 = arith.subf %27, %26 : vector<304x1xf32>
    %29 = math.exp %28 : vector<304x1xf32>
    %cst_7 = arith.constant 1.000000e+00 : f32
    %30 = vector.broadcast %cst_7 : f32 to vector<304x1xf32>
    %31 = arith.subf %30, %29 : vector<304x1xf32>
    %cst_8 = arith.constant 1.000000e+00 : f32
    %32 = vector.broadcast %cst_8 : f32 to vector<304x1xf32>
    %33 = arith.mulf %32, %31 : vector<304x1xf32>
    %34 = arith.mulf %33, %31 : vector<304x1xf32>
    %cst_9 = arith.constant 0.000000e+00 : f32
    %35 = vector.broadcast %cst_9 : f32 to vector<304x1xf32>
    %36 = arith.subf %35, %34 : vector<304x1xf32>
    %37 = arith.mulf %36, %26 : vector<304x1xf32>
    %cst_10 = arith.constant 0.000000e+00 : f32
    %38 = vector.broadcast %cst_10 : f32 to vector<304x1xf32>
    %39 = arith.select %10, %37, %38 : vector<304x1xi1>, vector<304x1xf32>
    %40 = vector.shape_cast %39 : vector<304x1xf32> to vector<1x304x1xf32>
    %cst_11 = arith.constant dense<0.000000e+00> : vector<1xf32>
    %41 = vector.multi_reduction <add>, %40, %cst_11 [1, 2] : vector<1x304x1xf32> to vector<1xf32>
    %42 = vector.shape_cast %41 : vector<1xf32> to vector<1x1x1xf32>
    %43 = vector.extract %42[0, 0, 0] : f32 from vector<1x1x1xf32>
    %44 = vector.broadcast %43 : f32 to vector<1x1x1xf32>
    %c0_12 = arith.constant 0 : index
    %c0_13 = arith.constant 0 : index
    %c0_14 = arith.constant 0 : index
    %45 = vector.load %arg3[%c0_12, %c0_13, %c0_14] : memref<1x1x1xf32, #tpu.memory_space<vmem>>, vector<1x1x1xf32>
    tpu.vector_store %arg3[%c0_12, %c0_13, %c0_14], %44 {strides = array<i32>} : memref<1x1x1xf32, #tpu.memory_space<vmem>>, vector<1x1x1xf32>,
    return
  }
  func.func @transform_0(%arg0: i32) -> (i32, i32) {
    %c0_i32 = arith.constant 0 : i32
    %c0_i32_0 = arith.constant 0 : i32
    return %arg0, %c0_i32 : i32, i32
  }
  func.func @transform_1(%arg0: i32) -> (i32, i32) {
    %c0_i32 = arith.constant 0 : i32
    %c0_i32_0 = arith.constant 0 : i32
    return %arg0, %c0_i32 : i32, i32
  }
  func.func @transform_2(%arg0: i32) -> (i32, i32, i32) {
    %c0_i32 = arith.constant 0 : i32
    %c0_i32_0 = arith.constant 0 : i32
    %c0_i32_1 = arith.constant 0 : i32
    return %arg0, %c0_i32, %c0_i32_0 : i32, i32, i32
  }
}

</mosaic_0001>

<llo_original>
// kernel: tpu_custom_call.1
$region0: #{tpu_custom_call.1}
  #allocation0 [shape = 'u32[]', space=smem, size = 0x4, offset = 0x4, fixed_abs, tag = 'smem constant byte address 0x4 - core index']
  #allocation1 [shape = 'u32[144,128]{1,0:T(1,128)}', space=vmem, size = 0x12000, scoped, tag = 'internal scratch']
  %s0 = inlined_call_operand.vmem [shape: f32[300,16], index: 0, kind: input, shape index: {}]
  %s1 = inlined_call_operand.vmem [shape: s32[300,1], index: 1, kind: input, shape index: {}]
  %s2 = inlined_call_operand.hbm [shape: f32[1,1,1], index: 2, kind: output, shape index: {}]
  %s3 = sld [smem:[#allocation0]]
  $region18: #{tpu_custom_call.1} parent=0
    _
  %s5 = ssub.s32 1, %s3
  %s6 = scalar_select 0, %s5, %s3
  $region1: #{tpu_custom_call.1} parent=0
    #allocation2 [shape = 'u8[512]{0}', space=vmem, size = 0x400, scoped, tag = 'output window, operand 0, single buffered']
    #allocation3 [shape = 's32[1]{0}', space=sflag, size = 0x4, scoped, tag = 'scoped memory for tpu_custom_call.1']
    %7 = vsyncpa [#allocation3], 0
    // Predicated region
    $region2: #{tpu_custom_call.1} parent=1 // pred_check
      _
    $region3: #{tpu_custom_call.1} parent=1 // pred_check_branch
      %9 = sbr.rel (0) target = $region5
    $region4: #{tpu_custom_call.1} parent=1 // pred_region
      _
    $region5: #{tpu_custom_call.1} parent=1 // pred_fallthru
      _
    // Predicated region
    $region6: #{tpu_custom_call.1} parent=1 // pred_check
      _
    $region7: #{tpu_custom_call.1} parent=1 // pred_check_branch
      %11 = sbr.rel (0) target = $region9
    $region8: #{tpu_custom_call.1} parent=1 // pred_region
      _
    $region9: #{tpu_custom_call.1} parent=1 // pred_fallthru
      _
    %v12 = vld [vmem:[%s0] sm:$0xff]
    %v13 = vld [vmem:[%s0 + $0x8] sm:$0xff]
    %v14 = vld [vmem:[%s0 + $0x10] sm:$0xff]
    %v15 = vld [vmem:[%s0 + $0x18] sm:$0xff]
    %v16 = vld [vmem:[%s0 + $0x20] sm:$0xff]
    %v17 = vld [vmem:[%s0 + $0x28] sm:$0xff]
    %v18 = vld [vmem:[%s0 + $0x30] sm:$0xff]
    %v19 = vld [vmem:[%s0 + $0x38] sm:$0xff]
    %v20 = vld [vmem:[%s0 + $0x40] sm:$0xff]
    %v21 = vld [vmem:[%s0 + $0x48] sm:$0xff]
    %v22 = vld [vmem:[%s0 + $0x50] sm:$0xff]
    %v23 = vld [vmem:[%s0 + $0x58] sm:$0xff]
    %v24 = vld [vmem:[%s0 + $0x60] sm:$0xff]
    %v25 = vld [vmem:[%s0 + $0x68] sm:$0xff]
    %v26 = vld [vmem:[%s0 + $0x70] sm:$0xff]
    %v27 = vld [vmem:[%s0 + $0x78] sm:$0xff]
    %v28 = vld [vmem:[%s0 + $0x80] sm:$0xff]
    %v29 = vld [vmem:[%s0 + $0x88] sm:$0xff]
    %v30 = vld [vmem:[%s0 + $0x90] sm:$0xff]
    %v31 = vld [vmem:[%s0 + $0x98] sm:$0xff]
    %v32 = vld [vmem:[%s0 + $0xa0] sm:$0xff]
    %v33 = vld [vmem:[%s0 + $0xa8] sm:$0xff]
    %v34 = vld [vmem:[%s0 + $0xb0] sm:$0xff]
    %v35 = vld [vmem:[%s0 + $0xb8] sm:$0xff]
    %v36 = vld [vmem:[%s0 + $0xc0] sm:$0xff]
    %v37 = vld [vmem:[%s0 + $0xc8] sm:$0xff]
    %v38 = vld [vmem:[%s0 + $0xd0] sm:$0xff]
    %v39 = vld [vmem:[%s0 + $0xd8] sm:$0xff]
    %v40 = vld [vmem:[%s0 + $0xe0] sm:$0xff]
    %v41 = vld [vmem:[%s0 + $0xe8] sm:$0xff]
    %v42 = vld [vmem:[%s0 + $0xf0] sm:$0xff]
    %v43 = vld [vmem:[%s0 + $0xf8] sm:$0xff]
    %v44 = vld [vmem:[%s0 + $0x100] sm:$0xff]
    %v45 = vld [vmem:[%s0 + $0x108] sm:$0xff]
    %v46 = vld [vmem:[%s0 + $0x110] sm:$0xff]
    %v47 = vld [vmem:[%s0 + $0x118] sm:$0xff]
    %v48 = vld [vmem:[%s0 + $0x120] sm:$0xff]
    %v49 = vld [vmem:[%s0 + $0x128] sm:$0xff]
    %v50 = vld [vmem:[%s1] sm:$0xff]
    %v51 = vld [vmem:[%s1 + $0x8] sm:$0xff]
    %v52 = vld [vmem:[%s1 + $0x10] sm:$0xff]
    %v53 = vld [vmem:[%s1 + $0x18] sm:$0xff]
    %v54 = vld [vmem:[%s1 + $0x20] sm:$0xff]
    %v55 = vld [vmem:[%s1 + $0x28] sm:$0xff]
    %v56 = vld [vmem:[%s1 + $0x30] sm:$0xff]
    %v57 = vld [vmem:[%s1 + $0x38] sm:$0xff]
    %v58 = vld [vmem:[%s1 + $0x40] sm:$0xff]
    %v59 = vld [vmem:[%s1 + $0x48] sm:$0xff]
    %v60 = vld [vmem:[%s1 + $0x50] sm:$0xff]
    %v61 = vld [vmem:[%s1 + $0x58] sm:$0xff]
    %v62 = vld [vmem:[%s1 + $0x60] sm:$0xff]
    %v63 = vld [vmem:[%s1 + $0x68] sm:$0xff]
    %v64 = vld [vmem:[%s1 + $0x70] sm:$0xff]
    %v65 = vld [vmem:[%s1 + $0x78] sm:$0xff]
    %v66 = vld [vmem:[%s1 + $0x80] sm:$0xff]
    %v67 = vld [vmem:[%s1 + $0x88] sm:$0xff]
    %v68 = vld [vmem:[%s1 + $0x90] sm:$0xff]
    %v69 = vld [vmem:[%s1 + $0x98] sm:$0xff]
    %v70 = vld [vmem:[%s1 + $0xa0] sm:$0xff]
    %v71 = vld [vmem:[%s1 + $0xa8] sm:$0xff]
    %v72 = vld [vmem:[%s1 + $0xb0] sm:$0xff]
    %v73 = vld [vmem:[%s1 + $0xb8] sm:$0xff]
    %v74 = vld [vmem:[%s1 + $0xc0] sm:$0xff]
    %v75 = vld [vmem:[%s1 + $0xc8] sm:$0xff]
    %v76 = vld [vmem:[%s1 + $0xd0] sm:$0xff]
    %v77 = vld [vmem:[%s1 + $0xd8] sm:$0xff]
    %v78 = vld [vmem:[%s1 + $0xe0] sm:$0xff]
    %v79 = vld [vmem:[%s1 + $0xe8] sm:$0xff]
    %v80 = vld [vmem:[%s1 + $0xf0] sm:$0xff]
    %v81 = vld [vmem:[%s1 + $0xf8] sm:$0xff]
    %v82 = vld [vmem:[%s1 + $0x100] sm:$0xff]
    %v83 = vld [vmem:[%s1 + $0x108] sm:$0xff]
    %v84 = vld [vmem:[%s1 + $0x110] sm:$0xff]
    %v85 = vld [vmem:[%s1 + $0x118] sm:$0xff]
    %v86 = vld [vmem:[%s1 + $0x120] sm:$0xff]
    %v87 = vld [vmem:[%s1 + $0x128] sm:$0xff]
    %s88 = smul.u32 0, 304
    %v89 = vlaneseq
    %v90 = vshrl.u32 %v89, 7
    %v91 = vadd.s32 %v90, 8
    %v92 = vadd.s32 %v90, 16
    %v93 = vadd.s32 %v90, 24
    %v94 = vadd.s32 %v90, 32
    %v95 = vadd.s32 %v90, 40
    %v96 = vadd.s32 %v90, 48
    %v97 = vadd.s32 %v90, 56
    %v98 = vadd.s32 %v90, 64
    %v99 = vadd.s32 %v90, 72
    %v100 = vadd.s32 %v90, 80
    %v101 = vadd.s32 %v90, 88
    %v102 = vadd.s32 %v90, 96
    %v103 = vadd.s32 %v90, 104
    %v104 = vadd.s32 %v90, 112
    %v105 = vadd.s32 %v90, 120
    %v106 = vadd.s32 %v90, 128
    %v107 = vadd.s32 %v90, 136
    %v108 = vadd.s32 %v90, 144
    %v109 = vadd.s32 %v90, 152
    %v110 = vadd.s32 %v90, 160
    %v111 = vadd.s32 %v90, 168
    %v112 = vadd.s32 %v90, 176
    %v113 = vadd.s32 %v90, 184
    %v114 = vadd.s32 %v90, 192
    %v115 = vadd.s32 %v90, 200
    %v116 = vadd.s32 %v90, 208
    %v117 = vadd.s32 %v90, 216
    %v118 = vadd.s32 %v90, 224
    %v119 = vadd.s32 %v90, 232
    %v120 = vadd.s32 %v90, 240
    %v121 = vadd.s32 %v90, 248
    %v122 = vadd.s32 %v90, 256
    %v123 = vadd.s32 %v90, 264
    %v124 = vadd.s32 %v90, 272
    %v125 = vadd.s32 %v90, 280
    %v126 = vadd.s32 %v90, 288
    %v127 = vadd.s32 %v90, 296
    %v128 = vstv %s88
    %v129 = vadd.s32 %v128, %v90
    %v130 = vadd.s32 %v128, %v91
    %v131 = vadd.s32 %v128, %v92
    %v132 = vadd.s32 %v128, %v93
    %v133 = vadd.s32 %v128, %v94
    %v134 = vadd.s32 %v128, %v95
    %v135 = vadd.s32 %v128, %v96
    %v136 = vadd.s32 %v128, %v97
    %v137 = vadd.s32 %v128, %v98
    %v138 = vadd.s32 %v128, %v99
    %v139 = vadd.s32 %v128, %v100
    %v140 = vadd.s32 %v128, %v101
    %v141 = vadd.s32 %v128, %v102
    %v142 = vadd.s32 %v128, %v103
    %v143 = vadd.s32 %v128, %v104
    %v144 = vadd.s32 %v128, %v105
    %v145 = vadd.s32 %v128, %v106
    %v146 = vadd.s32 %v128, %v107
    %v147 = vadd.s32 %v128, %v108
    %v148 = vadd.s32 %v128, %v109
    %v149 = vadd.s32 %v128, %v110
    %v150 = vadd.s32 %v128, %v111
    %v151 = vadd.s32 %v128, %v112
    %v152 = vadd.s32 %v128, %v113
    %v153 = vadd.s32 %v128, %v114
    %v154 = vadd.s32 %v128, %v115
    %v155 = vadd.s32 %v128, %v116
    %v156 = vadd.s32 %v128, %v117
    %v157 = vadd.s32 %v128, %v118
    %v158 = vadd.s32 %v128, %v119
    %v159 = vadd.s32 %v128, %v120
    %v160 = vadd.s32 %v128, %v121
    %v161 = vadd.s32 %v128, %v122
    %v162 = vadd.s32 %v128, %v123
    %v163 = vadd.s32 %v128, %v124
    %v164 = vadd.s32 %v128, %v125
    %v165 = vadd.s32 %v128, %v126
    %v166 = vadd.s32 %v128, %v127
    %vm167 = vcmp.lt.s32.totalorder %v129, 300
    %vm168 = vcmp.lt.s32.totalorder %v130, 300
    %vm169 = vcmp.lt.s32.totalorder %v131, 300
    %vm170 = vcmp.lt.s32.totalorder %v132, 300
    %vm171 = vcmp.lt.s32.totalorder %v133, 300
    %vm172 = vcmp.lt.s32.totalorder %v134, 300
    %vm173 = vcmp.lt.s32.totalorder %v135, 300
    %vm174 = vcmp.lt.s32.totalorder %v136, 300
    %vm175 = vcmp.lt.s32.totalorder %v137, 300
    %vm176 = vcmp.lt.s32.totalorder %v138, 300
    %vm177 = vcmp.lt.s32.totalorder %v139, 300
    %vm178 = vcmp.lt.s32.totalorder %v140, 300
    %vm179 = vcmp.lt.s32.totalorder %v141, 300
    %vm180 = vcmp.lt.s32.totalorder %v142, 300
    %vm181 = vcmp.lt.s32.totalorder %v143, 300
    %vm182 = vcmp.lt.s32.totalorder %v144, 300
    %vm183 = vcmp.lt.s32.totalorder %v145, 300
    %vm184 = vcmp.lt.s32.totalorder %v146, 300
    %vm185 = vcmp.lt.s32.totalorder %v147, 300
    %vm186 = vcmp.lt.s32.totalorder %v148, 300
    %vm187 = vcmp.lt.s32.totalorder %v149, 300
    %vm188 = vcmp.lt.s32.totalorder %v150, 300
    %vm189 = vcmp.lt.s32.totalorder %v151, 300
    %vm190 = vcmp.lt.s32.totalorder %v152, 300
    %vm191 = vcmp.lt.s32.totalorder %v153, 300
    %vm192 = vcmp.lt.s32.totalorder %v154, 300
    %vm193 = vcmp.lt.s32.totalorder %v155, 300
    %vm194 = vcmp.lt.s32.totalorder %v156, 300
    %vm195 = vcmp.lt.s32.totalorder %v157, 300
    %vm196 = vcmp.lt.s32.totalorder %v158, 300
    %vm197 = vcmp.lt.s32.totalorder %v159, 300
    %vm198 = vcmp.lt.s32.totalorder %v160, 300
    %vm199 = vcmp.lt.s32.totalorder %v161, 300
    %vm200 = vcmp.lt.s32.totalorder %v162, 300
    %vm201 = vcmp.lt.s32.totalorder %v163, 300
    %vm202 = vcmp.lt.s32.totalorder %v164, 300
    %vm203 = vcmp.lt.s32.totalorder %v165, 300
    %vm204 = vcmp.lt.s32.totalorder %v166, 300
    %vm205 = vcmp.ne.s32.totalorder %v50, 4294967295
    %vm206 = vcmp.ne.s32.totalorder %v51, 4294967295
    %vm207 = vcmp.ne.s32.totalorder %v52, 4294967295
    %vm208 = vcmp.ne.s32.totalorder %v53, 4294967295
    %vm209 = vcmp.ne.s32.totalorder %v54, 4294967295
    %vm210 = vcmp.ne.s32.totalorder %v55, 4294967295
    %vm211 = vcmp.ne.s32.totalorder %v56, 4294967295
    %vm212 = vcmp.ne.s32.totalorder %v57, 4294967295
    %vm213 = vcmp.ne.s32.totalorder %v58, 4294967295
    %vm214 = vcmp.ne.s32.totalorder %v59, 4294967295
    %vm215 = vcmp.ne.s32.totalorder %v60, 4294967295
    %vm216 = vcmp.ne.s32.totalorder %v61, 4294967295
    %vm217 = vcmp.ne.s32.totalorder %v62, 4294967295
    %vm218 = vcmp.ne.s32.totalorder %v63, 4294967295
    %vm219 = vcmp.ne.s32.totalorder %v64, 4294967295
    %vm220 = vcmp.ne.s32.totalorder %v65, 4294967295
    %vm221 = vcmp.ne.s32.totalorder %v66, 4294967295
    %vm222 = vcmp.ne.s32.totalorder %v67, 4294967295
    %vm223 = vcmp.ne.s32.totalorder %v68, 4294967295
    %vm224 = vcmp.ne.s32.totalorder %v69, 4294967295
    %vm225 = vcmp.ne.s32.totalorder %v70, 4294967295
    %vm226 = vcmp.ne.s32.totalorder %v71, 4294967295
    %vm227 = vcmp.ne.s32.totalorder %v72, 4294967295
    %vm228 = vcmp.ne.s32.totalorder %v73, 4294967295
    %vm229 = vcmp.ne.s32.totalorder %v74, 4294967295
    %vm230 = vcmp.ne.s32.totalorder %v75, 4294967295
    %vm231 = vcmp.ne.s32.totalorder %v76, 4294967295
    %vm232 = vcmp.ne.s32.totalorder %v77, 4294967295
    %vm233 = vcmp.ne.s32.totalorder %v78, 4294967295
    %vm234 = vcmp.ne.s32.totalorder %v79, 4294967295
    %vm235 = vcmp.ne.s32.totalorder %v80, 4294967295
    %vm236 = vcmp.ne.s32.totalorder %v81, 4294967295
    %vm237 = vcmp.ne.s32.totalorder %v82, 4294967295
    %vm238 = vcmp.ne.s32.totalorder %v83, 4294967295
    %vm239 = vcmp.ne.s32.totalorder %v84, 4294967295
    %vm240 = vcmp.ne.s32.totalorder %v85, 4294967295
    %vm241 = vcmp.ne.s32.totalorder %v86, 4294967295
    %vm242 = vcmp.ne.s32.totalorder %v87, 4294967295
    %vm243 = vmand %vm167, %vm205
    %vm244 = vmand %vm168, %vm206
    %vm245 = vmand %vm169, %vm207
    %vm246 = vmand %vm170, %vm208
    %vm247 = vmand %vm171, %vm209
    %vm248 = vmand %vm172, %vm210
    %vm249 = vmand %vm173, %vm211
    %vm250 = vmand %vm174, %vm212
    %vm251 = vmand %vm175, %vm213
    %vm252 = vmand %vm176, %vm214
    %vm253 = vmand %vm177, %vm215
    %vm254 = vmand %vm178, %vm216
    %vm255 = vmand %vm179, %vm217
    %vm256 = vmand %vm180, %vm218
    %vm257 = vmand %vm181, %vm219
    %vm258 = vmand %vm182, %vm220
    %vm259 = vmand %vm183, %vm221
    %vm260 = vmand %vm184, %vm222
    %vm261 = vmand %vm185, %vm223
    %vm262 = vmand %vm186, %vm224
    %vm263 = vmand %vm187, %vm225
    %vm264 = vmand %vm188, %vm226
    %vm265 = vmand %vm189, %vm227
    %vm266 = vmand %vm190, %vm228
    %vm267 = vmand %vm191, %vm229
    %vm268 = vmand %vm192, %vm230
    %vm269 = vmand %vm193, %vm231
    %vm270 = vmand %vm194, %vm232
    %vm271 = vmand %vm195, %vm233
    %vm272 = vmand %vm196, %vm234
    %vm273 = vmand %vm197, %vm235
    %vm274 = vmand %vm198, %vm236
    %vm275 = vmand %vm199, %vm237
    %vm276 = vmand %vm200, %vm238
    %vm277 = vmand %vm201, %vm239
    %vm278 = vmand %vm202, %vm240
    %vm279 = vmand %vm203, %vm241
    %vm280 = vmand %vm204, %vm242
    %vm281 = vcmask 130048
    %v282 = vsel %vm281, %v12, -inf
    %283 = vmax.xlane.f32.xlu0 %v282
    %v284 = vpop.xlane.xlu0 %283
    %v285 = vsel %vm281, %v13, -inf
    %286 = vmax.xlane.f32.xlu0 %v285
    %v287 = vpop.xlane.xlu0 %286
    %v288 = vsel %vm281, %v14, -inf
    %289 = vmax.xlane.f32.xlu0 %v288
    %v290 = vpop.xlane.xlu0 %289
    %v291 = vsel %vm281, %v15, -inf
    %292 = vmax.xlane.f32.xlu0 %v291
    %v293 = vpop.xlane.xlu0 %292
    %v294 = vsel %vm281, %v16, -inf
    %295 = vmax.xlane.f32.xlu0 %v294
    %v296 = vpop.xlane.xlu0 %295
    %v297 = vsel %vm281, %v17, -inf
    %298 = vmax.xlane.f32.xlu0 %v297
    %v299 = vpop.xlane.xlu0 %298
    %v300 = vsel %vm281, %v18, -inf
    %301 = vmax.xlane.f32.xlu0 %v300
    %v302 = vpop.xlane.xlu0 %301
    %v303 = vsel %vm281, %v19, -inf
    %304 = vmax.xlane.f32.xlu0 %v303
    %v305 = vpop.xlane.xlu0 %304
    %v306 = vsel %vm281, %v20, -inf
    %307 = vmax.xlane.f32.xlu0 %v306
    %v308 = vpop.xlane.xlu0 %307
    %v309 = vsel %vm281, %v21, -inf
    %310 = vmax.xlane.f32.xlu0 %v309
    %v311 = vpop.xlane.xlu0 %310
    %v312 = vsel %vm281, %v22, -inf
    %313 = vmax.xlane.f32.xlu0 %v312
    %v314 = vpop.xlane.xlu0 %313
    %v315 = vsel %vm281, %v23, -inf
    %316 = vmax.xlane.f32.xlu0 %v315
    %v317 = vpop.xlane.xlu0 %316
    %v318 = vsel %vm281, %v24, -inf
    %319 = vmax.xlane.f32.xlu0 %v318
    %v320 = vpop.xlane.xlu0 %319
    %v321 = vsel %vm281, %v25, -inf
    %322 = vmax.xlane.f32.xlu0 %v321
    %v323 = vpop.xlane.xlu0 %322
    %v324 = vsel %vm281, %v26, -inf
    %325 = vmax.xlane.f32.xlu0 %v324
    %v326 = vpop.xlane.xlu0 %325
    %v327 = vsel %vm281, %v27, -inf
    %328 = vmax.xlane.f32.xlu0 %v327
    %v329 = vpop.xlane.xlu0 %328
    %v330 = vsel %vm281, %v28, -inf
    %331 = vmax.xlane.f32.xlu0 %v330
    %v332 = vpop.xlane.xlu0 %331
    %v333 = vsel %vm281, %v29, -inf
    %334 = vmax.xlane.f32.xlu0 %v333
    %v335 = vpop.xlane.xlu0 %334
    %v336 = vsel %vm281, %v30, -inf
    %337 = vmax.xlane.f32.xlu0 %v336
    %v338 = vpop.xlane.xlu0 %337
    %v339 = vsel %vm281, %v31, -inf
    %340 = vmax.xlane.f32.xlu0 %v339
    %v341 = vpop.xlane.xlu0 %340
    %v342 = vsel %vm281, %v32, -inf
    %343 = vmax.xlane.f32.xlu0 %v342
    %v344 = vpop.xlane.xlu0 %343
    %v345 = vsel %vm281, %v33, -inf
    %346 = vmax.xlane.f32.xlu0 %v345
    %v347 = vpop.xlane.xlu0 %346
    %v348 = vsel %vm281, %v34, -inf
    %349 = vmax.xlane.f32.xlu0 %v348
    %v350 = vpop.xlane.xlu0 %349
    %v351 = vsel %vm281, %v35, -inf
    %352 = vmax.xlane.f32.xlu0 %v351
    %v353 = vpop.xlane.xlu0 %352
    %v354 = vsel %vm281, %v36, -inf
    %355 = vmax.xlane.f32.xlu0 %v354
    %v356 = vpop.xlane.xlu0 %355
    %v357 = vsel %vm281, %v37, -inf
    %358 = vmax.xlane.f32.xlu0 %v357
    %v359 = vpop.xlane.xlu0 %358
    %v360 = vsel %vm281, %v38, -inf
    %361 = vmax.xlane.f32.xlu0 %v360
    %v362 = vpop.xlane.xlu0 %361
    %v363 = vsel %vm281, %v39, -inf
    %364 = vmax.xlane.f32.xlu0 %v363
    %v365 = vpop.xlane.xlu0 %364
    %v366 = vsel %vm281, %v40, -inf
    %367 = vmax.xlane.f32.xlu0 %v366
    %v368 = vpop.xlane.xlu0 %367
    %v369 = vsel %vm281, %v41, -inf
    %370 = vmax.xlane.f32.xlu0 %v369
    %v371 = vpop.xlane.xlu0 %370
    %v372 = vsel %vm281, %v42, -inf
    %373 = vmax.xlane.f32.xlu0 %v372
    %v374 = vpop.xlane.xlu0 %373
    %v375 = vsel %vm281, %v43, -inf
    %376 = vmax.xlane.f32.xlu0 %v375
    %v377 = vpop.xlane.xlu0 %376
    %v378 = vsel %vm281, %v44, -inf
    %379 = vmax.xlane.f32.xlu0 %v378
    %v380 = vpop.xlane.xlu0 %379
    %v381 = vsel %vm281, %v45, -inf
    %382 = vmax.xlane.f32.xlu0 %v381
    %v383 = vpop.xlane.xlu0 %382
    %v384 = vsel %vm281, %v46, -inf
    %385 = vmax.xlane.f32.xlu0 %v384
    %v386 = vpop.xlane.xlu0 %385
    %v387 = vsel %vm281, %v47, -inf
    %388 = vmax.xlane.f32.xlu0 %v387
    %v389 = vpop.xlane.xlu0 %388
    %v390 = vsel %vm281, %v48, -inf
    %391 = vmax.xlane.f32.xlu0 %v390
    %v392 = vpop.xlane.xlu0 %391
    %v393 = vsel %vm281, %v49, -inf
    %394 = vmax.xlane.f32.xlu0 %v393
    %v395 = vpop.xlane.xlu0 %394
    %v396 = vsub.f32 %v12, %v284
    %v397 = vsub.f32 %v13, %v287
    %v398 = vsub.f32 %v14, %v290
    %v399 = vsub.f32 %v15, %v293
    %v400 = vsub.f32 %v16, %v296
    %v401 = vsub.f32 %v17, %v299
    %v402 = vsub.f32 %v18, %v302
    %v403 = vsub.f32 %v19, %v305
    %v404 = vsub.f32 %v20, %v308
    %v405 = vsub.f32 %v21, %v311
    %v406 = vsub.f32 %v22, %v314
    %v407 = vsub.f32 %v23, %v317
    %v408 = vsub.f32 %v24, %v320
    %v409 = vsub.f32 %v25, %v323
    %v410 = vsub.f32 %v26, %v326
    %v411 = vsub.f32 %v27, %v329
    %v412 = vsub.f32 %v28, %v332
    %v413 = vsub.f32 %v29, %v335
    %v414 = vsub.f32 %v30, %v338
    %v415 = vsub.f32 %v31, %v341
    %v416 = vsub.f32 %v32, %v344
    %v417 = vsub.f32 %v33, %v347
    %v418 = vsub.f32 %v34, %v350
    %v419 = vsub.f32 %v35, %v353
    %v420 = vsub.f32 %v36, %v356
    %v421 = vsub.f32 %v37, %v359
    %v422 = vsub.f32 %v38, %v362
    %v423 = vsub.f32 %v39, %v365
    %v424 = vsub.f32 %v40, %v368
    %v425 = vsub.f32 %v41, %v371
    %v426 = vsub.f32 %v42, %v374
    %v427 = vsub.f32 %v43, %v377
    %v428 = vsub.f32 %v44, %v380
    %v429 = vsub.f32 %v45, %v383
    %v430 = vsub.f32 %v46, %v386
    %v431 = vsub.f32 %v47, %v389
    %v432 = vsub.f32 %v48, %v392
    %v433 = vsub.f32 %v49, %v395
    %v434 = vmul.f32 %v396, 1.442695
    %v435 = vpow.pop %v434
    %v436 = vmul.f32 %v397, 1.442695
    %v437 = vpow.pop %v436
    %v438 = vmul.f32 %v398, 1.442695
    %v439 = vpow.pop %v438
    %v440 = vmul.f32 %v399, 1.442695
    %v441 = vpow.pop %v440
    %v442 = vmul.f32 %v400, 1.442695
    %v443 = vpow.pop %v442
    %v444 = vmul.f32 %v401, 1.442695
    %v445 = vpow.pop %v444
    %v446 = vmul.f32 %v402, 1.442695
    %v447 = vpow.pop %v446
    %v448 = vmul.f32 %v403, 1.442695
    %v449 = vpow.pop %v448
    %v450 = vmul.f32 %v404, 1.442695
    %v451 = vpow.pop %v450
    %v452 = vmul.f32 %v405, 1.442695
    %v453 = vpow.pop %v452
    %v454 = vmul.f32 %v406, 1.442695
    %v455 = vpow.pop %v454
    %v456 = vmul.f32 %v407, 1.442695
    %v457 = vpow.pop %v456
    %v458 = vmul.f32 %v408, 1.442695
    %v459 = vpow.pop %v458
    %v460 = vmul.f32 %v409, 1.442695
    %v461 = vpow.pop %v460
    %v462 = vmul.f32 %v410, 1.442695
    %v463 = vpow.pop %v462
    %v464 = vmul.f32 %v411, 1.442695
    %v465 = vpow.pop %v464
    %v466 = vmul.f32 %v412, 1.442695
    %v467 = vpow.pop %v466
    %v468 = vmul.f32 %v413, 1.442695
    %v469 = vpow.pop %v468
    %v470 = vmul.f32 %v414, 1.442695
    %v471 = vpow.pop %v470
    %v472 = vmul.f32 %v415, 1.442695
    %v473 = vpow.pop %v472
    %v474 = vmul.f32 %v416, 1.442695
    %v475 = vpow.pop %v474
    %v476 = vmul.f32 %v417, 1.442695
    %v477 = vpow.pop %v476
    %v478 = vmul.f32 %v418, 1.442695
    %v479 = vpow.pop %v478
    %v480 = vmul.f32 %v419, 1.442695
    %v481 = vpow.pop %v480
    %v482 = vmul.f32 %v420, 1.442695
    %v483 = vpow.pop %v482
    %v484 = vmul.f32 %v421, 1.442695
    %v485 = vpow.pop %v484
    %v486 = vmul.f32 %v422, 1.442695
    %v487 = vpow.pop %v486
    %v488 = vmul.f32 %v423, 1.442695
    %v489 = vpow.pop %v488
    %v490 = vmul.f32 %v424, 1.442695
    %v491 = vpow.pop %v490
    %v492 = vmul.f32 %v425, 1.442695
    %v493 = vpow.pop %v492
    %v494 = vmul.f32 %v426, 1.442695
    %v495 = vpow.pop %v494
    %v496 = vmul.f32 %v427, 1.442695
    %v497 = vpow.pop %v496
    %v498 = vmul.f32 %v428, 1.442695
    %v499 = vpow.pop %v498
    %v500 = vmul.f32 %v429, 1.442695
    %v501 = vpow.pop %v500
    %v502 = vmul.f32 %v430, 1.442695
    %v503 = vpow.pop %v502
    %v504 = vmul.f32 %v431, 1.442695
    %v505 = vpow.pop %v504
    %v506 = vmul.f32 %v432, 1.442695
    %v507 = vpow.pop %v506
    %v508 = vmul.f32 %v433, 1.442695
    %v509 = vpow.pop %v508
    %v510 = vsel %vm281, %v435, 0.0
    %511 = vadd.xlane.f32.xlu0 %v510
    %v512 = vpop.xlane.xlu0 %511
    %v513 = vsel %vm281, %v437, 0.0
    %514 = vadd.xlane.f32.xlu0 %v513
    %v515 = vpop.xlane.xlu0 %514
    %v516 = vsel %vm281, %v439, 0.0
    %517 = vadd.xlane.f32.xlu0 %v516
    %v518 = vpop.xlane.xlu0 %517
    %v519 = vsel %vm281, %v441, 0.0
    %520 = vadd.xlane.f32.xlu0 %v519
    %v521 = vpop.xlane.xlu0 %520
    %v522 = vsel %vm281, %v443, 0.0
    %523 = vadd.xlane.f32.xlu0 %v522
    %v524 = vpop.xlane.xlu0 %523
    %v525 = vsel %vm281, %v445, 0.0
    %526 = vadd.xlane.f32.xlu0 %v525
    %v527 = vpop.xlane.xlu0 %526
    %v528 = vsel %vm281, %v447, 0.0
    %529 = vadd.xlane.f32.xlu0 %v528
    %v530 = vpop.xlane.xlu0 %529
    %v531 = vsel %vm281, %v449, 0.0
    %532 = vadd.xlane.f32.xlu0 %v531
    %v533 = vpop.xlane.xlu0 %532
    %v534 = vsel %vm281, %v451, 0.0
    %535 = vadd.xlane.f32.xlu0 %v534
    %v536 = vpop.xlane.xlu0 %535
    %v537 = vsel %vm281, %v453, 0.0
    %538 = vadd.xlane.f32.xlu0 %v537
    %v539 = vpop.xlane.xlu0 %538
    %v540 = vsel %vm281, %v455, 0.0
    %541 = vadd.xlane.f32.xlu0 %v540
    %v542 = vpop.xlane.xlu0 %541
    %v543 = vsel %vm281, %v457, 0.0
    %544 = vadd.xlane.f32.xlu0 %v543
    %v545 = vpop.xlane.xlu0 %544
    %v546 = vsel %vm281, %v459, 0.0
    %547 = vadd.xlane.f32.xlu0 %v546
    %v548 = vpop.xlane.xlu0 %547
    %v549 = vsel %vm281, %v461, 0.0
    %550 = vadd.xlane.f32.xlu0 %v549
    %v551 = vpop.xlane.xlu0 %550
    %v552 = vsel %vm281, %v463, 0.0
    %553 = vadd.xlane.f32.xlu0 %v552
    %v554 = vpop.xlane.xlu0 %553
    %v555 = vsel %vm281, %v465, 0.0
    %556 = vadd.xlane.f32.xlu0 %v555
    %v557 = vpop.xlane.xlu0 %556
    %v558 = vsel %vm281, %v467, 0.0
    %559 = vadd.xlane.f32.xlu0 %v558
    %v560 = vpop.xlane.xlu0 %559
    %v561 = vsel %vm281, %v469, 0.0
    %562 = vadd.xlane.f32.xlu0 %v561
    %v563 = vpop.xlane.xlu0 %562
    %v564 = vsel %vm281, %v471, 0.0
    %565 = vadd.xlane.f32.xlu0 %v564
    %v566 = vpop.xlane.xlu0 %565
    %v567 = vsel %vm281, %v473, 0.0
    %568 = vadd.xlane.f32.xlu0 %v567
    %v569 = vpop.xlane.xlu0 %568
    %v570 = vsel %vm281, %v475, 0.0
    %571 = vadd.xlane.f32.xlu0 %v570
    %v572 = vpop.xlane.xlu0 %571
    %v573 = vsel %vm281, %v477, 0.0
    %574 = vadd.xlane.f32.xlu0 %v573
    %v575 = vpop.xlane.xlu0 %574
    %v576 = vsel %vm281, %v479, 0.0
    %577 = vadd.xlane.f32.xlu0 %v576
    %v578 = vpop.xlane.xlu0 %577
    %v579 = vsel %vm281, %v481, 0.0
    %580 = vadd.xlane.f32.xlu0 %v579
    %v581 = vpop.xlane.xlu0 %580
    %v582 = vsel %vm281, %v483, 0.0
    %583 = vadd.xlane.f32.xlu0 %v582
    %v584 = vpop.xlane.xlu0 %583
    %v585 = vsel %vm281, %v485, 0.0
    %586 = vadd.xlane.f32.xlu0 %v585
    %v587 = vpop.xlane.xlu0 %586
    %v588 = vsel %vm281, %v487, 0.0
    %589 = vadd.xlane.f32.xlu0 %v588
    %v590 = vpop.xlane.xlu0 %589
    %v591 = vsel %vm281, %v489, 0.0
    %592 = vadd.xlane.f32.xlu0 %v591
    %v593 = vpop.xlane.xlu0 %592
    %v594 = vsel %vm281, %v491, 0.0
    %595 = vadd.xlane.f32.xlu0 %v594
    %v596 = vpop.xlane.xlu0 %595
    %v597 = vsel %vm281, %v493, 0.0
    %598 = vadd.xlane.f32.xlu0 %v597
    %v599 = vpop.xlane.xlu0 %598
    %v600 = vsel %vm281, %v495, 0.0
    %601 = vadd.xlane.f32.xlu0 %v600
    %v602 = vpop.xlane.xlu0 %601
    %v603 = vsel %vm281, %v497, 0.0
    %604 = vadd.xlane.f32.xlu0 %v603
    %v605 = vpop.xlane.xlu0 %604
    %v606 = vsel %vm281, %v499, 0.0
    %607 = vadd.xlane.f32.xlu0 %v606
    %v608 = vpop.xlane.xlu0 %607
    %v609 = vsel %vm281, %v501, 0.0
    %610 = vadd.xlane.f32.xlu0 %v609
    %v611 = vpop.xlane.xlu0 %610
    %v612 = vsel %vm281, %v503, 0.0
    %613 = vadd.xlane.f32.xlu0 %v612
    %v614 = vpop.xlane.xlu0 %613
    %v615 = vsel %vm281, %v505, 0.0
    %616 = vadd.xlane.f32.xlu0 %v615
    %v617 = vpop.xlane.xlu0 %616
    %v618 = vsel %vm281, %v507, 0.0
    %619 = vadd.xlane.f32.xlu0 %v618
    %v620 = vpop.xlane.xlu0 %619
    %v621 = vsel %vm281, %v509, 0.0
    %622 = vadd.xlane.f32.xlu0 %v621
    %v623 = vpop.xlane.xlu0 %622
    %v624 = vlaneseq
    %v625 = vand.u32 %v624, 127
    %626 = vset.pattern.permute.xlu0 0
    %627 = vperm.xlu0 %626, %v50
    %v628 = vpop.permute.xlu0 %627
    %629 = vset.pattern.permute.xlu0 0
    %630 = vperm.xlu0 %629, %v51
    %v631 = vpop.permute.xlu0 %630
    %632 = vset.pattern.permute.xlu0 0
    %633 = vperm.xlu0 %632, %v52
    %v634 = vpop.permute.xlu0 %633
    %635 = vset.pattern.permute.xlu0 0
    %636 = vperm.xlu0 %635, %v53
    %v637 = vpop.permute.xlu0 %636
    %638 = vset.pattern.permute.xlu0 0
    %639 = vperm.xlu0 %638, %v54
    %v640 = vpop.permute.xlu0 %639
    %641 = vset.pattern.permute.xlu0 0
    %642 = vperm.xlu0 %641, %v55
    %v643 = vpop.permute.xlu0 %642
    %644 = vset.pattern.permute.xlu0 0
    %645 = vperm.xlu0 %644, %v56
    %v646 = vpop.permute.xlu0 %645
    %647 = vset.pattern.permute.xlu0 0
    %648 = vperm.xlu0 %647, %v57
    %v649 = vpop.permute.xlu0 %648
    %650 = vset.pattern.permute.xlu0 0
    %651 = vperm.xlu0 %650, %v58
    %v652 = vpop.permute.xlu0 %651
    %653 = vset.pattern.permute.xlu0 0
    %654 = vperm.xlu0 %653, %v59
    %v655 = vpop.permute.xlu0 %654
    %656 = vset.pattern.permute.xlu0 0
    %657 = vperm.xlu0 %656, %v60
    %v658 = vpop.permute.xlu0 %657
    %659 = vset.pattern.permute.xlu0 0
    %660 = vperm.xlu0 %659, %v61
    %v661 = vpop.permute.xlu0 %660
    %662 = vset.pattern.permute.xlu0 0
    %663 = vperm.xlu0 %662, %v62
    %v664 = vpop.permute.xlu0 %663
    %665 = vset.pattern.permute.xlu0 0
    %666 = vperm.xlu0 %665, %v63
    %v667 = vpop.permute.xlu0 %666
    %668 = vset.pattern.permute.xlu0 0
    %669 = vperm.xlu0 %668, %v64
    %v670 = vpop.permute.xlu0 %669
    %671 = vset.pattern.permute.xlu0 0
    %672 = vperm.xlu0 %671, %v65
    %v673 = vpop.permute.xlu0 %672
    %674 = vset.pattern.permute.xlu0 0
    %675 = vperm.xlu0 %674, %v66
    %v676 = vpop.permute.xlu0 %675
    %677 = vset.pattern.permute.xlu0 0
    %678 = vperm.xlu0 %677, %v67
    %v679 = vpop.permute.xlu0 %678
    %680 = vset.pattern.permute.xlu0 0
    %681 = vperm.xlu0 %680, %v68
    %v682 = vpop.permute.xlu0 %681
    %683 = vset.pattern.permute.xlu0 0
    %684 = vperm.xlu0 %683, %v69
    %v685 = vpop.permute.xlu0 %684
    %686 = vset.pattern.permute.xlu0 0
    %687 = vperm.xlu0 %686, %v70
    %v688 = vpop.permute.xlu0 %687
    %689 = vset.pattern.permute.xlu0 0
    %690 = vperm.xlu0 %689, %v71
    %v691 = vpop.permute.xlu0 %690
    %692 = vset.pattern.permute.xlu0 0
    %693 = vperm.xlu0 %692, %v72
    %v694 = vpop.permute.xlu0 %693
    %695 = vset.pattern.permute.xlu0 0
    %696 = vperm.xlu0 %695, %v73
    %v697 = vpop.permute.xlu0 %696
    %698 = vset.pattern.permute.xlu0 0
    %699 = vperm.xlu0 %698, %v74
    %v700 = vpop.permute.xlu0 %699
    %701 = vset.pattern.permute.xlu0 0
    %702 = vperm.xlu0 %701, %v75
    %v703 = vpop.permute.xlu0 %702
    %704 = vset.pattern.permute.xlu0 0
    %705 = vperm.xlu0 %704, %v76
    %v706 = vpop.permute.xlu0 %705
    %707 = vset.pattern.permute.xlu0 0
    %708 = vperm.xlu0 %707, %v77
    %v709 = vpop.permute.xlu0 %708
    %710 = vset.pattern.permute.xlu0 0
    %711 = vperm.xlu0 %710, %v78
    %v712 = vpop.permute.xlu0 %711
    %713 = vset.pattern.permute.xlu0 0
    %714 = vperm.xlu0 %713, %v79
    %v715 = vpop.permute.xlu0 %714
    %716 = vset.pattern.permute.xlu0 0
    %717 = vperm.xlu0 %716, %v80
    %v718 = vpop.permute.xlu0 %717
    %719 = vset.pattern.permute.xlu0 0
    %720 = vperm.xlu0 %719, %v81
    %v721 = vpop.permute.xlu0 %720
    %722 = vset.pattern.permute.xlu0 0
    %723 = vperm.xlu0 %722, %v82
    %v724 = vpop.permute.xlu0 %723
    %725 = vset.pattern.permute.xlu0 0
    %726 = vperm.xlu0 %725, %v83
    %v727 = vpop.permute.xlu0 %726
    %728 = vset.pattern.permute.xlu0 0
    %729 = vperm.xlu0 %728, %v84
    %v730 = vpop.permute.xlu0 %729
    %731 = vset.pattern.permute.xlu0 0
    %732 = vperm.xlu0 %731, %v85
    %v733 = vpop.permute.xlu0 %732
    %734 = vset.pattern.permute.xlu0 0
    %735 = vperm.xlu0 %734, %v86
    %v736 = vpop.permute.xlu0 %735
    %737 = vset.pattern.permute.xlu0 0
    %738 = vperm.xlu0 %737, %v87
    %v739 = vpop.permute.xlu0 %738
    %vm740 = vcmp.eq.s32.totalorder %v625, %v628
    %vm741 = vcmp.eq.s32.totalorder %v625, %v631
    %vm742 = vcmp.eq.s32.totalorder %v625, %v634
    %vm743 = vcmp.eq.s32.totalorder %v625, %v637
    %vm744 = vcmp.eq.s32.totalorder %v625, %v640
    %vm745 = vcmp.eq.s32.totalorder %v625, %v643
    %vm746 = vcmp.eq.s32.totalorder %v625, %v646
    %vm747 = vcmp.eq.s32.totalorder %v625, %v649
    %vm748 = vcmp.eq.s32.totalorder %v625, %v652
    %vm749 = vcmp.eq.s32.totalorder %v625, %v655
    %vm750 = vcmp.eq.s32.totalorder %v625, %v658
    %vm751 = vcmp.eq.s32.totalorder %v625, %v661
    %vm752 = vcmp.eq.s32.totalorder %v625, %v664
    %vm753 = vcmp.eq.s32.totalorder %v625, %v667
    %vm754 = vcmp.eq.s32.totalorder %v625, %v670
    %vm755 = vcmp.eq.s32.totalorder %v625, %v673
    %vm756 = vcmp.eq.s32.totalorder %v625, %v676
    %vm757 = vcmp.eq.s32.totalorder %v625, %v679
    %vm758 = vcmp.eq.s32.totalorder %v625, %v682
    %vm759 = vcmp.eq.s32.totalorder %v625, %v685
    %vm760 = vcmp.eq.s32.totalorder %v625, %v688
    %vm761 = vcmp.eq.s32.totalorder %v625, %v691
    %vm762 = vcmp.eq.s32.totalorder %v625, %v694
    %vm763 = vcmp.eq.s32.totalorder %v625, %v697
    %vm764 = vcmp.eq.s32.totalorder %v625, %v700
    %vm765 = vcmp.eq.s32.totalorder %v625, %v703
    %vm766 = vcmp.eq.s32.totalorder %v625, %v706
    %vm767 = vcmp.eq.s32.totalorder %v625, %v709
    %vm768 = vcmp.eq.s32.totalorder %v625, %v712
    %vm769 = vcmp.eq.s32.totalorder %v625, %v715
    %vm770 = vcmp.eq.s32.totalorder %v625, %v718
    %vm771 = vcmp.eq.s32.totalorder %v625, %v721
    %vm772 = vcmp.eq.s32.totalorder %v625, %v724
    %vm773 = vcmp.eq.s32.totalorder %v625, %v727
    %vm774 = vcmp.eq.s32.totalorder %v625, %v730
    %vm775 = vcmp.eq.s32.totalorder %v625, %v733
    %vm776 = vcmp.eq.s32.totalorder %v625, %v736
    %vm777 = vcmp.eq.s32.totalorder %v625, %v739
    %v778 = vsel %vm740, %v396, 0.0
    %v779 = vsel %vm741, %v397, 0.0
    %v780 = vsel %vm742, %v398, 0.0
    %v781 = vsel %vm743, %v399, 0.0
    %v782 = vsel %vm744, %v400, 0.0
    %v783 = vsel %vm745, %v401, 0.0
    %v784 = vsel %vm746, %v402, 0.0
    %v785 = vsel %vm747, %v403, 0.0
    %v786 = vsel %vm748, %v404, 0.0
    %v787 = vsel %vm749, %v405, 0.0
    %v788 = vsel %vm750, %v406, 0.0
    %v789 = vsel %vm751, %v407, 0.0
    %v790 = vsel %vm752, %v408, 0.0
    %v791 = vsel %vm753, %v409, 0.0
    %v792 = vsel %vm754, %v410, 0.0
    %v793 = vsel %vm755, %v411, 0.0
    %v794 = vsel %vm756, %v412, 0.0
    %v795 = vsel %vm757, %v413, 0.0
    %v796 = vsel %vm758, %v414, 0.0
    %v797 = vsel %vm759, %v415, 0.0
    %v798 = vsel %vm760, %v416, 0.0
    %v799 = vsel %vm761, %v417, 0.0
    %v800 = vsel %vm762, %v418, 0.0
    %v801 = vsel %vm763, %v419, 0.0
    %v802 = vsel %vm764, %v420, 0.0
    %v803 = vsel %vm765, %v421, 0.0
    %v804 = vsel %vm766, %v422, 0.0
    %v805 = vsel %vm767, %v423, 0.0
    %v806 = vsel %vm768, %v424, 0.0
    %v807 = vsel %vm769, %v425, 0.0
    %v808 = vsel %vm770, %v426, 0.0
    %v809 = vsel %vm771, %v427, 0.0
    %v810 = vsel %vm772, %v428, 0.0
    %v811 = vsel %vm773, %v429, 0.0
    %v812 = vsel %vm774, %v430, 0.0
    %v813 = vsel %vm775, %v431, 0.0
    %v814 = vsel %vm776, %v432, 0.0
    %v815 = vsel %vm777, %v433, 0.0
    %v816 = vsel %vm281, %v778, 0.0
    %817 = vadd.xlane.f32.xlu0 %v816
    %v818 = vpop.xlane.xlu0 %817
    %v819 = vsel %vm281, %v779, 0.0
    %820 = vadd.xlane.f32.xlu0 %v819
    %v821 = vpop.xlane.xlu0 %820
    %v822 = vsel %vm281, %v780, 0.0
    %823 = vadd.xlane.f32.xlu0 %v822
    %v824 = vpop.xlane.xlu0 %823
    %v825 = vsel %vm281, %v781, 0.0
    %826 = vadd.xlane.f32.xlu0 %v825
    %v827 = vpop.xlane.xlu0 %826
    %v828 = vsel %vm281, %v782, 0.0
    %829 = vadd.xlane.f32.xlu0 %v828
    %v830 = vpop.xlane.xlu0 %829
    %v831 = vsel %vm281, %v783, 0.0
    %832 = vadd.xlane.f32.xlu0 %v831
    %v833 = vpop.xlane.xlu0 %832
    %v834 = vsel %vm281, %v784, 0.0
    %835 = vadd.xlane.f32.xlu0 %v834
    %v836 = vpop.xlane.xlu0 %835
    %v837 = vsel %vm281, %v785, 0.0
    %838 = vadd.xlane.f32.xlu0 %v837
    %v839 = vpop.xlane.xlu0 %838
    %v840 = vsel %vm281, %v786, 0.0
    %841 = vadd.xlane.f32.xlu0 %v840
    %v842 = vpop.xlane.xlu0 %841
    %v843 = vsel %vm281, %v787, 0.0
    %844 = vadd.xlane.f32.xlu0 %v843
    %v845 = vpop.xlane.xlu0 %844
    %v846 = vsel %vm281, %v788, 0.0
    %847 = vadd.xlane.f32.xlu0 %v846
    %v848 = vpop.xlane.xlu0 %847
    %v849 = vsel %vm281, %v789, 0.0
    %850 = vadd.xlane.f32.xlu0 %v849
    %v851 = vpop.xlane.xlu0 %850
    %v852 = vsel %vm281, %v790, 0.0
    %853 = vadd.xlane.f32.xlu0 %v852
    %v854 = vpop.xlane.xlu0 %853
    %v855 = vsel %vm281, %v791, 0.0
    %856 = vadd.xlane.f32.xlu0 %v855
    %v857 = vpop.xlane.xlu0 %856
    %v858 = vsel %vm281, %v792, 0.0
    %859 = vadd.xlane.f32.xlu0 %v858
    %v860 = vpop.xlane.xlu0 %859
    %v861 = vsel %vm281, %v793, 0.0
    %862 = vadd.xlane.f32.xlu0 %v861
    %v863 = vpop.xlane.xlu0 %862
    %v864 = vsel %vm281, %v794, 0.0
    %865 = vadd.xlane.f32.xlu0 %v864
    %v866 = vpop.xlane.xlu0 %865
    %v867 = vsel %vm281, %v795, 0.0
    %868 = vadd.xlane.f32.xlu0 %v867
    %v869 = vpop.xlane.xlu0 %868
    %v870 = vsel %vm281, %v796, 0.0
    %871 = vadd.xlane.f32.xlu0 %v870
    %v872 = vpop.xlane.xlu0 %871
    %v873 = vsel %vm281, %v797, 0.0
    %874 = vadd.xlane.f32.xlu0 %v873
    %v875 = vpop.xlane.xlu0 %874
    %v876 = vsel %vm281, %v798, 0.0
    %877 = vadd.xlane.f32.xlu0 %v876
    %v878 = vpop.xlane.xlu0 %877
    %v879 = vsel %vm281, %v799, 0.0
    %880 = vadd.xlane.f32.xlu0 %v879
    %v881 = vpop.xlane.xlu0 %880
    %v882 = vsel %vm281, %v800, 0.0
    %883 = vadd.xlane.f32.xlu0 %v882
    %v884 = vpop.xlane.xlu0 %883
    %v885 = vsel %vm281, %v801, 0.0
    %886 = vadd.xlane.f32.xlu0 %v885
    %v887 = vpop.xlane.xlu0 %886
    %v888 = vsel %vm281, %v802, 0.0
    %889 = vadd.xlane.f32.xlu0 %v888
    %v890 = vpop.xlane.xlu0 %889
    %v891 = vsel %vm281, %v803, 0.0
    %892 = vadd.xlane.f32.xlu0 %v891
    %v893 = vpop.xlane.xlu0 %892
    %v894 = vsel %vm281, %v804, 0.0
    %895 = vadd.xlane.f32.xlu0 %v894
    %v896 = vpop.xlane.xlu0 %895
    %v897 = vsel %vm281, %v805, 0.0
    %898 = vadd.xlane.f32.xlu0 %v897
    %v899 = vpop.xlane.xlu0 %898
    %v900 = vsel %vm281, %v806, 0.0
    %901 = vadd.xlane.f32.xlu0 %v900
    %v902 = vpop.xlane.xlu0 %901
    %v903 = vsel %vm281, %v807, 0.0
    %904 = vadd.xlane.f32.xlu0 %v903
    %v905 = vpop.xlane.xlu0 %904
    %v906 = vsel %vm281, %v808, 0.0
    %907 = vadd.xlane.f32.xlu0 %v906
    %v908 = vpop.xlane.xlu0 %907
    %v909 = vsel %vm281, %v809, 0.0
    %910 = vadd.xlane.f32.xlu0 %v909
    %v911 = vpop.xlane.xlu0 %910
    %v912 = vsel %vm281, %v810, 0.0
    %913 = vadd.xlane.f32.xlu0 %v912
    %v914 = vpop.xlane.xlu0 %913
    %v915 = vsel %vm281, %v811, 0.0
    %916 = vadd.xlane.f32.xlu0 %v915
    %v917 = vpop.xlane.xlu0 %916
    %v918 = vsel %vm281, %v812, 0.0
    %919 = vadd.xlane.f32.xlu0 %v918
    %v920 = vpop.xlane.xlu0 %919
    %v921 = vsel %vm281, %v813, 0.0
    %922 = vadd.xlane.f32.xlu0 %v921
    %v923 = vpop.xlane.xlu0 %922
    %v924 = vsel %vm281, %v814, 0.0
    %925 = vadd.xlane.f32.xlu0 %v924
    %v926 = vpop.xlane.xlu0 %925
    %v927 = vsel %vm281, %v815, 0.0
    %928 = vadd.xlane.f32.xlu0 %v927
    %v929 = vpop.xlane.xlu0 %928
    %v930 = vlog2.pop %v512
    %v931 = vmul.f32 %v930, 0.6931472
    %v932 = vlog2.pop %v515
    %v933 = vmul.f32 %v932, 0.6931472
    %v934 = vlog2.pop %v518
    %v935 = vmul.f32 %v934, 0.6931472
    %v936 = vlog2.pop %v521
    %v937 = vmul.f32 %v936, 0.6931472
    %v938 = vlog2.pop %v524
    %v939 = vmul.f32 %v938, 0.6931472
    %v940 = vlog2.pop %v527
    %v941 = vmul.f32 %v940, 0.6931472
    %v942 = vlog2.pop %v530
    %v943 = vmul.f32 %v942, 0.6931472
    %v944 = vlog2.pop %v533
    %v945 = vmul.f32 %v944, 0.6931472
    %v946 = vlog2.pop %v536
    %v947 = vmul.f32 %v946, 0.6931472
    %v948 = vlog2.pop %v539
    %v949 = vmul.f32 %v948, 0.6931472
    %v950 = vlog2.pop %v542
    %v951 = vmul.f32 %v950, 0.6931472
    %v952 = vlog2.pop %v545
    %v953 = vmul.f32 %v952, 0.6931472
    %v954 = vlog2.pop %v548
    %v955 = vmul.f32 %v954, 0.6931472
    %v956 = vlog2.pop %v551
    %v957 = vmul.f32 %v956, 0.6931472
    %v958 = vlog2.pop %v554
    %v959 = vmul.f32 %v958, 0.6931472
    %v960 = vlog2.pop %v557
    %v961 = vmul.f32 %v960, 0.6931472
    %v962 = vlog2.pop %v560
    %v963 = vmul.f32 %v962, 0.6931472
    %v964 = vlog2.pop %v563
    %v965 = vmul.f32 %v964, 0.6931472
    %v966 = vlog2.pop %v566
    %v967 = vmul.f32 %v966, 0.6931472
    %v968 = vlog2.pop %v569
    %v969 = vmul.f32 %v968, 0.6931472
    %v970 = vlog2.pop %v572
    %v971 = vmul.f32 %v970, 0.6931472
    %v972 = vlog2.pop %v575
    %v973 = vmul.f32 %v972, 0.6931472
    %v974 = vlog2.pop %v578
    %v975 = vmul.f32 %v974, 0.6931472
    %v976 = vlog2.pop %v581
    %v977 = vmul.f32 %v976, 0.6931472
    %v978 = vlog2.pop %v584
    %v979 = vmul.f32 %v978, 0.6931472
    %v980 = vlog2.pop %v587
    %v981 = vmul.f32 %v980, 0.6931472
    %v982 = vlog2.pop %v590
    %v983 = vmul.f32 %v982, 0.6931472
    %v984 = vlog2.pop %v593
    %v985 = vmul.f32 %v984, 0.6931472
    %v986 = vlog2.pop %v596
    %v987 = vmul.f32 %v986, 0.6931472
    %v988 = vlog2.pop %v599
    %v989 = vmul.f32 %v988, 0.6931472
    %v990 = vlog2.pop %v602
    %v991 = vmul.f32 %v990, 0.6931472
    %v992 = vlog2.pop %v605
    %v993 = vmul.f32 %v992, 0.6931472
    %v994 = vlog2.pop %v608
    %v995 = vmul.f32 %v994, 0.6931472
    %v996 = vlog2.pop %v611
    %v997 = vmul.f32 %v996, 0.6931472
    %v998 = vlog2.pop %v614
    %v999 = vmul.f32 %v998, 0.6931472
    %v1000 = vlog2.pop %v617
    %v1001 = vmul.f32 %v1000, 0.6931472
    %v1002 = vlog2.pop %v620
    %v1003 = vmul.f32 %v1002, 0.6931472
    %v1004 = vlog2.pop %v623
    %v1005 = vmul.f32 %v1004, 0.6931472
    %v1006 = vsub.f32 %v931, %v818
    %v1007 = vsub.f32 %v933, %v821
    %v1008 = vsub.f32 %v935, %v824
    %v1009 = vsub.f32 %v937, %v827
    %v1010 = vsub.f32 %v939, %v830
    %v1011 = vsub.f32 %v941, %v833
    %v1012 = vsub.f32 %v943, %v836
    %v1013 = vsub.f32 %v945, %v839
    %v1014 = vsub.f32 %v947, %v842
    %v1015 = vsub.f32 %v949, %v845
    %v1016 = vsub.f32 %v951, %v848
    %v1017 = vsub.f32 %v953, %v851
    %v1018 = vsub.f32 %v955, %v854
    %v1019 = vsub.f32 %v957, %v857
    %v1020 = vsub.f32 %v959, %v860
    %v1021 = vsub.f32 %v961, %v863
    %v1022 = vsub.f32 %v963, %v866
    %v1023 = vsub.f32 %v965, %v869
    %v1024 = vsub.f32 %v967, %v872
    %v1025 = vsub.f32 %v969, %v875
    %v1026 = vsub.f32 %v971, %v878
    %v1027 = vsub.f32 %v973, %v881
    %v1028 = vsub.f32 %v975, %v884
    %v1029 = vsub.f32 %v977, %v887
    %v1030 = vsub.f32 %v979, %v890
    %v1031 = vsub.f32 %v981, %v893
    %v1032 = vsub.f32 %v983, %v896
    %v1033 = vsub.f32 %v985, %v899
    %v1034 = vsub.f32 %v987, %v902
    %v1035 = vsub.f32 %v989, %v905
    %v1036 = vsub.f32 %v991, %v908
    %v1037 = vsub.f32 %v993, %v911
    %v1038 = vsub.f32 %v995, %v914
    %v1039 = vsub.f32 %v997, %v917
    %v1040 = vsub.f32 %v999, %v920
    %v1041 = vsub.f32 %v1001, %v923
    %v1042 = vsub.f32 %v1003, %v926
    %v1043 = vsub.f32 %v1005, %v929
    %v1044 = vsub.f32 0.0, %v1006
    %v1045 = vsub.f32 0.0, %v1007
    %v1046 = vsub.f32 0.0, %v1008
    %v1047 = vsub.f32 0.0, %v1009
    %v1048 = vsub.f32 0.0, %v1010
    %v1049 = vsub.f32 0.0, %v1011
    %v1050 = vsub.f32 0.0, %v1012
    %v1051 = vsub.f32 0.0, %v1013
    %v1052 = vsub.f32 0.0, %v1014
    %v1053 = vsub.f32 0.0, %v1015
    %v1054 = vsub.f32 0.0, %v1016
    %v1055 = vsub.f32 0.0, %v1017
    %v1056 = vsub.f32 0.0, %v1018
    %v1057 = vsub.f32 0.0, %v1019
    %v1058 = vsub.f32 0.0, %v1020
    %v1059 = vsub.f32 0.0, %v1021
    %v1060 = vsub.f32 0.0, %v1022
    %v1061 = vsub.f32 0.0, %v1023
    %v1062 = vsub.f32 0.0, %v1024
    %v1063 = vsub.f32 0.0, %v1025
    %v1064 = vsub.f32 0.0, %v1026
    %v1065 = vsub.f32 0.0, %v1027
    %v1066 = vsub.f32 0.0, %v1028
    %v1067 = vsub.f32 0.0, %v1029
    %v1068 = vsub.f32 0.0, %v1030
    %v1069 = vsub.f32 0.0, %v1031
    %v1070 = vsub.f32 0.0, %v1032
    %v1071 = vsub.f32 0.0, %v1033
    %v1072 = vsub.f32 0.0, %v1034
    %v1073 = vsub.f32 0.0, %v1035
    %v1074 = vsub.f32 0.0, %v1036
    %v1075 = vsub.f32 0.0, %v1037
    %v1076 = vsub.f32 0.0, %v1038
    %v1077 = vsub.f32 0.0, %v1039
    %v1078 = vsub.f32 0.0, %v1040
    %v1079 = vsub.f32 0.0, %v1041
    %v1080 = vsub.f32 0.0, %v1042
    %v1081 = vsub.f32 0.0, %v1043
    %v1082 = vmul.f32 %v1044, 1.442695
    %v1083 = vpow.pop %v1082
    %v1084 = vmul.f32 %v1045, 1.442695
    %v1085 = vpow.pop %v1084
    %v1086 = vmul.f32 %v1046, 1.442695
    %v1087 = vpow.pop %v1086
    %v1088 = vmul.f32 %v1047, 1.442695
    %v1089 = vpow.pop %v1088
    %v1090 = vmul.f32 %v1048, 1.442695
    %v1091 = vpow.pop %v1090
    %v1092 = vmul.f32 %v1049, 1.442695
    %v1093 = vpow.pop %v1092
    %v1094 = vmul.f32 %v1050, 1.442695
    %v1095 = vpow.pop %v1094
    %v1096 = vmul.f32 %v1051, 1.442695
    %v1097 = vpow.pop %v1096
    %v1098 = vmul.f32 %v1052, 1.442695
    %v1099 = vpow.pop %v1098
    %v1100 = vmul.f32 %v1053, 1.442695
    %v1101 = vpow.pop %v1100
    %v1102 = vmul.f32 %v1054, 1.442695
    %v1103 = vpow.pop %v1102
    %v1104 = vmul.f32 %v1055, 1.442695
    %v1105 = vpow.pop %v1104
    %v1106 = vmul.f32 %v1056, 1.442695
    %v1107 = vpow.pop %v1106
    %v1108 = vmul.f32 %v1057, 1.442695
    %v1109 = vpow.pop %v1108
    %v1110 = vmul.f32 %v1058, 1.442695
    %v1111 = vpow.pop %v1110
    %v1112 = vmul.f32 %v1059, 1.442695
    %v1113 = vpow.pop %v1112
    %v1114 = vmul.f32 %v1060, 1.442695
    %v1115 = vpow.pop %v1114
    %v1116 = vmul.f32 %v1061, 1.442695
    %v1117 = vpow.pop %v1116
    %v1118 = vmul.f32 %v1062, 1.442695
    %v1119 = vpow.pop %v1118
    %v1120 = vmul.f32 %v1063, 1.442695
    %v1121 = vpow.pop %v1120
    %v1122 = vmul.f32 %v1064, 1.442695
    %v1123 = vpow.pop %v1122
    %v1124 = vmul.f32 %v1065, 1.442695
    %v1125 = vpow.pop %v1124
    %v1126 = vmul.f32 %v1066, 1.442695
    %v1127 = vpow.pop %v1126
    %v1128 = vmul.f32 %v1067, 1.442695
    %v1129 = vpow.pop %v1128
    %v1130 = vmul.f32 %v1068, 1.442695
    %v1131 = vpow.pop %v1130
    %v1132 = vmul.f32 %v1069, 1.442695
    %v1133 = vpow.pop %v1132
    %v1134 = vmul.f32 %v1070, 1.442695
    %v1135 = vpow.pop %v1134
    %v1136 = vmul.f32 %v1071, 1.442695
    %v1137 = vpow.pop %v1136
    %v1138 = vmul.f32 %v1072, 1.442695
    %v1139 = vpow.pop %v1138
    %v1140 = vmul.f32 %v1073, 1.442695
    %v1141 = vpow.pop %v1140
    %v1142 = vmul.f32 %v1074, 1.442695
    %v1143 = vpow.pop %v1142
    %v1144 = vmul.f32 %v1075, 1.442695
    %v1145 = vpow.pop %v1144
    %v1146 = vmul.f32 %v1076, 1.442695
    %v1147 = vpow.pop %v1146
    %v1148 = vmul.f32 %v1077, 1.442695
    %v1149 = vpow.pop %v1148
    %v1150 = vmul.f32 %v1078, 1.442695
    %v1151 = vpow.pop %v1150
    %v1152 = vmul.f32 %v1079, 1.442695
    %v1153 = vpow.pop %v1152
    %v1154 = vmul.f32 %v1080, 1.442695
    %v1155 = vpow.pop %v1154
    %v1156 = vmul.f32 %v1081, 1.442695
    %v1157 = vpow.pop %v1156
    %v1158 = vsub.f32 1.0, %v1083
    %v1159 = vsub.f32 1.0, %v1085
    %v1160 = vsub.f32 1.0, %v1087
    %v1161 = vsub.f32 1.0, %v1089
    %v1162 = vsub.f32 1.0, %v1091
    %v1163 = vsub.f32 1.0, %v1093
    %v1164 = vsub.f32 1.0, %v1095
    %v1165 = vsub.f32 1.0, %v1097
    %v1166 = vsub.f32 1.0, %v1099
    %v1167 = vsub.f32 1.0, %v1101
    %v1168 = vsub.f32 1.0, %v1103
    %v1169 = vsub.f32 1.0, %v1105
    %v1170 = vsub.f32 1.0, %v1107
    %v1171 = vsub.f32 1.0, %v1109
    %v1172 = vsub.f32 1.0, %v1111
    %v1173 = vsub.f32 1.0, %v1113
    %v1174 = vsub.f32 1.0, %v1115
    %v1175 = vsub.f32 1.0, %v1117
    %v1176 = vsub.f32 1.0, %v1119
    %v1177 = vsub.f32 1.0, %v1121
    %v1178 = vsub.f32 1.0, %v1123
    %v1179 = vsub.f32 1.0, %v1125
    %v1180 = vsub.f32 1.0, %v1127
    %v1181 = vsub.f32 1.0, %v1129
    %v1182 = vsub.f32 1.0, %v1131
    %v1183 = vsub.f32 1.0, %v1133
    %v1184 = vsub.f32 1.0, %v1135
    %v1185 = vsub.f32 1.0, %v1137
    %v1186 = vsub.f32 1.0, %v1139
    %v1187 = vsub.f32 1.0, %v1141
    %v1188 = vsub.f32 1.0, %v1143
    %v1189 = vsub.f32 1.0, %v1145
    %v1190 = vsub.f32 1.0, %v1147
    %v1191 = vsub.f32 1.0, %v1149
    %v1192 = vsub.f32 1.0, %v1151
    %v1193 = vsub.f32 1.0, %v1153
    %v1194 = vsub.f32 1.0, %v1155
    %v1195 = vsub.f32 1.0, %v1157
    %v1196 = vmul.f32 %v1158, %v1158
    %v1197 = vmul.f32 %v1159, %v1159
    %v1198 = vmul.f32 %v1160, %v1160
    %v1199 = vmul.f32 %v1161, %v1161
    %v1200 = vmul.f32 %v1162, %v1162
    %v1201 = vmul.f32 %v1163, %v1163
    %v1202 = vmul.f32 %v1164, %v1164
    %v1203 = vmul.f32 %v1165, %v1165
    %v1204 = vmul.f32 %v1166, %v1166
    %v1205 = vmul.f32 %v1167, %v1167
    %v1206 = vmul.f32 %v1168, %v1168
    %v1207 = vmul.f32 %v1169, %v1169
    %v1208 = vmul.f32 %v1170, %v1170
    %v1209 = vmul.f32 %v1171, %v1171
    %v1210 = vmul.f32 %v1172, %v1172
    %v1211 = vmul.f32 %v1173, %v1173
    %v1212 = vmul.f32 %v1174, %v1174
    %v1213 = vmul.f32 %v1175, %v1175
    %v1214 = vmul.f32 %v1176, %v1176
    %v1215 = vmul.f32 %v1177, %v1177
    %v1216 = vmul.f32 %v1178, %v1178
    %v1217 = vmul.f32 %v1179, %v1179
    %v1218 = vmul.f32 %v1180, %v1180
    %v1219 = vmul.f32 %v1181, %v1181
    %v1220 = vmul.f32 %v1182, %v1182
    %v1221 = vmul.f32 %v1183, %v1183
    %v1222 = vmul.f32 %v1184, %v1184
    %v1223 = vmul.f32 %v1185, %v1185
    %v1224 = vmul.f32 %v1186, %v1186
    %v1225 = vmul.f32 %v1187, %v1187
    %v1226 = vmul.f32 %v1188, %v1188
    %v1227 = vmul.f32 %v1189, %v1189
    %v1228 = vmul.f32 %v1190, %v1190
    %v1229 = vmul.f32 %v1191, %v1191
    %v1230 = vmul.f32 %v1192, %v1192
    %v1231 = vmul.f32 %v1193, %v1193
    %v1232 = vmul.f32 %v1194, %v1194
    %v1233 = vmul.f32 %v1195, %v1195
    %v1234 = vsub.f32 0.0, %v1196
    %v1235 = vsub.f32 0.0, %v1197
    %v1236 = vsub.f32 0.0, %v1198
    %v1237 = vsub.f32 0.0, %v1199
    %v1238 = vsub.f32 0.0, %v1200
    %v1239 = vsub.f32 0.0, %v1201
    %v1240 = vsub.f32 0.0, %v1202
    %v1241 = vsub.f32 0.0, %v1203
    %v1242 = vsub.f32 0.0, %v1204
    %v1243 = vsub.f32 0.0, %v1205
    %v1244 = vsub.f32 0.0, %v1206
    %v1245 = vsub.f32 0.0, %v1207
    %v1246 = vsub.f32 0.0, %v1208
    %v1247 = vsub.f32 0.0, %v1209
    %v1248 = vsub.f32 0.0, %v1210
    %v1249 = vsub.f32 0.0, %v1211
    %v1250 = vsub.f32 0.0, %v1212
    %v1251 = vsub.f32 0.0, %v1213
    %v1252 = vsub.f32 0.0, %v1214
    %v1253 = vsub.f32 0.0, %v1215
    %v1254 = vsub.f32 0.0, %v1216
    %v1255 = vsub.f32 0.0, %v1217
    %v1256 = vsub.f32 0.0, %v1218
    %v1257 = vsub.f32 0.0, %v1219
    %v1258 = vsub.f32 0.0, %v1220
    %v1259 = vsub.f32 0.0, %v1221
    %v1260 = vsub.f32 0.0, %v1222
    %v1261 = vsub.f32 0.0, %v1223
    %v1262 = vsub.f32 0.0, %v1224
    %v1263 = vsub.f32 0.0, %v1225
    %v1264 = vsub.f32 0.0, %v1226
    %v1265 = vsub.f32 0.0, %v1227
    %v1266 = vsub.f32 0.0, %v1228
    %v1267 = vsub.f32 0.0, %v1229
    %v1268 = vsub.f32 0.0, %v1230
    %v1269 = vsub.f32 0.0, %v1231
    %v1270 = vsub.f32 0.0, %v1232
    %v1271 = vsub.f32 0.0, %v1233
    %v1272 = vmul.f32 %v1234, %v1006
    %v1273 = vmul.f32 %v1235, %v1007
    %v1274 = vmul.f32 %v1236, %v1008
    %v1275 = vmul.f32 %v1237, %v1009
    %v1276 = vmul.f32 %v1238, %v1010
    %v1277 = vmul.f32 %v1239, %v1011
    %v1278 = vmul.f32 %v1240, %v1012
    %v1279 = vmul.f32 %v1241, %v1013
    %v1280 = vmul.f32 %v1242, %v1014
    %v1281 = vmul.f32 %v1243, %v1015
    %v1282 = vmul.f32 %v1244, %v1016
    %v1283 = vmul.f32 %v1245, %v1017
    %v1284 = vmul.f32 %v1246, %v1018
    %v1285 = vmul.f32 %v1247, %v1019
    %v1286 = vmul.f32 %v1248, %v1020
    %v1287 = vmul.f32 %v1249, %v1021
    %v1288 = vmul.f32 %v1250, %v1022
    %v1289 = vmul.f32 %v1251, %v1023
    %v1290 = vmul.f32 %v1252, %v1024
    %v1291 = vmul.f32 %v1253, %v1025
    %v1292 = vmul.f32 %v1254, %v1026
    %v1293 = vmul.f32 %v1255, %v1027
    %v1294 = vmul.f32 %v1256, %v1028
    %v1295 = vmul.f32 %v1257, %v1029
    %v1296 = vmul.f32 %v1258, %v1030
    %v1297 = vmul.f32 %v1259, %v1031
    %v1298 = vmul.f32 %v1260, %v1032
    %v1299 = vmul.f32 %v1261, %v1033
    %v1300 = vmul.f32 %v1262, %v1034
    %v1301 = vmul.f32 %v1263, %v1035
    %v1302 = vmul.f32 %v1264, %v1036
    %v1303 = vmul.f32 %v1265, %v1037
    %v1304 = vmul.f32 %v1266, %v1038
    %v1305 = vmul.f32 %v1267, %v1039
    %v1306 = vmul.f32 %v1268, %v1040
    %v1307 = vmul.f32 %v1269, %v1041
    %v1308 = vmul.f32 %v1270, %v1042
    %v1309 = vmul.f32 %v1271, %v1043
    %v1310 = vsel %vm243, %v1272, 0.0
    %v1311 = vsel %vm244, %v1273, 0.0
    %v1312 = vsel %vm245, %v1274, 0.0
    %v1313 = vsel %vm246, %v1275, 0.0
    %v1314 = vsel %vm247, %v1276, 0.0
    %v1315 = vsel %vm248, %v1277, 0.0
    %v1316 = vsel %vm249, %v1278, 0.0
    %v1317 = vsel %vm250, %v1279, 0.0
    %v1318 = vsel %vm251, %v1280, 0.0
    %v1319 = vsel %vm252, %v1281, 0.0
    %v1320 = vsel %vm253, %v1282, 0.0
    %v1321 = vsel %vm254, %v1283, 0.0
    %v1322 = vsel %vm255, %v1284, 0.0
    %v1323 = vsel %vm256, %v1285, 0.0
    %v1324 = vsel %vm257, %v1286, 0.0
    %v1325 = vsel %vm258, %v1287, 0.0
    %v1326 = vsel %vm259, %v1288, 0.0
    %v1327 = vsel %vm260, %v1289, 0.0
    %v1328 = vsel %vm261, %v1290, 0.0
    %v1329 = vsel %vm262, %v1291, 0.0
    %v1330 = vsel %vm263, %v1292, 0.0
    %v1331 = vsel %vm264, %v1293, 0.0
    %v1332 = vsel %vm265, %v1294, 0.0
    %v1333 = vsel %vm266, %v1295, 0.0
    %v1334 = vsel %vm267, %v1296, 0.0
    %v1335 = vsel %vm268, %v1297, 0.0
    %v1336 = vsel %vm269, %v1298, 0.0
    %v1337 = vsel %vm270, %v1299, 0.0
    %v1338 = vsel %vm271, %v1300, 0.0
    %v1339 = vsel %vm272, %v1301, 0.0
    %v1340 = vsel %vm273, %v1302, 0.0
    %v1341 = vsel %vm274, %v1303, 0.0
    %v1342 = vsel %vm275, %v1304, 0.0
    %v1343 = vsel %vm276, %v1305, 0.0
    %v1344 = vsel %vm277, %v1306, 0.0
    %v1345 = vsel %vm278, %v1307, 0.0
    %v1346 = vsel %vm279, %v1308, 0.0
    %v1347 = vsel %vm280, %v1309, 0.0
    %vm1348 = vcmask 7168
    %v1349 = vsel %vm1348, %v1310, 0.0
    %v1350 = vsel %vm1348, %v1311, 0.0
    %v1351 = vadd.f32 %v1349, %v1350
    %v1352 = vsel %vm1348, %v1312, 0.0
    %v1353 = vadd.f32 %v1351, %v1352
    %v1354 = vsel %vm1348, %v1313, 0.0
    %v1355 = vadd.f32 %v1353, %v1354
    %v1356 = vsel %vm1348, %v1314, 0.0
    %v1357 = vadd.f32 %v1355, %v1356
    %v1358 = vsel %vm1348, %v1315, 0.0
    %v1359 = vadd.f32 %v1357, %v1358
    %v1360 = vsel %vm1348, %v1316, 0.0
    %v1361 = vadd.f32 %v1359, %v1360
    %v1362 = vsel %vm1348, %v1317, 0.0
    %v1363 = vadd.f32 %v1361, %v1362
    %v1364 = vsel %vm1348, %v1318, 0.0
    %v1365 = vadd.f32 %v1363, %v1364
    %v1366 = vsel %vm1348, %v1319, 0.0
    %v1367 = vadd.f32 %v1365, %v1366
    %v1368 = vsel %vm1348, %v1320, 0.0
    %v1369 = vadd.f32 %v1367, %v1368
    %v1370 = vsel %vm1348, %v1321, 0.0
    %v1371 = vadd.f32 %v1369, %v1370
    %v1372 = vsel %vm1348, %v1322, 0.0
    %v1373 = vadd.f32 %v1371, %v1372
    %v1374 = vsel %vm1348, %v1323, 0.0
    %v1375 = vadd.f32 %v1373, %v1374
    %v1376 = vsel %vm1348, %v1324, 0.0
    %v1377 = vadd.f32 %v1375, %v1376
    %v1378 = vsel %vm1348, %v1325, 0.0
    %v1379 = vadd.f32 %v1377, %v1378
    %v1380 = vsel %vm1348, %v1326, 0.0
    %v1381 = vadd.f32 %v1379, %v1380
    %v1382 = vsel %vm1348, %v1327, 0.0
    %v1383 = vadd.f32 %v1381, %v1382
    %v1384 = vsel %vm1348, %v1328, 0.0
    %v1385 = vadd.f32 %v1383, %v1384
    %v1386 = vsel %vm1348, %v1329, 0.0
    %v1387 = vadd.f32 %v1385, %v1386
    %v1388 = vsel %vm1348, %v1330, 0.0
    %v1389 = vadd.f32 %v1387, %v1388
    %v1390 = vsel %vm1348, %v1331, 0.0
    %v1391 = vadd.f32 %v1389, %v1390
    %v1392 = vsel %vm1348, %v1332, 0.0
    %v1393 = vadd.f32 %v1391, %v1392
    %v1394 = vsel %vm1348, %v1333, 0.0
    %v1395 = vadd.f32 %v1393, %v1394
    %v1396 = vsel %vm1348, %v1334, 0.0
    %v1397 = vadd.f32 %v1395, %v1396
    %v1398 = vsel %vm1348, %v1335, 0.0
    %v1399 = vadd.f32 %v1397, %v1398
    %v1400 = vsel %vm1348, %v1336, 0.0
    %v1401 = vadd.f32 %v1399, %v1400
    %v1402 = vsel %vm1348, %v1337, 0.0
    %v1403 = vadd.f32 %v1401, %v1402
    %v1404 = vsel %vm1348, %v1338, 0.0
    %v1405 = vadd.f32 %v1403, %v1404
    %v1406 = vsel %vm1348, %v1339, 0.0
    %v1407 = vadd.f32 %v1405, %v1406
    %v1408 = vsel %vm1348, %v1340, 0.0
    %v1409 = vadd.f32 %v1407, %v1408
    %v1410 = vsel %vm1348, %v1341, 0.0
    %v1411 = vadd.f32 %v1409, %v1410
    %v1412 = vsel %vm1348, %v1342, 0.0
    %v1413 = vadd.f32 %v1411, %v1412
    %v1414 = vsel %vm1348, %v1343, 0.0
    %v1415 = vadd.f32 %v1413, %v1414
    %v1416 = vsel %vm1348, %v1344, 0.0
    %v1417 = vadd.f32 %v1415, %v1416
    %v1418 = vsel %vm1348, %v1345, 0.0
    %v1419 = vadd.f32 %v1417, %v1418
    %v1420 = vsel %vm1348, %v1346, 0.0
    %v1421 = vadd.f32 %v1419, %v1420
    %v1422 = vsel %vm1348, %v1347, 0.0
    %v1423 = vadd.f32 %v1421, %v1422
    %1424 = vadd.xlane.f32.xlu0 %v1423
    %v1425 = vpop.xlane.xlu0 %1424
    %v1426 = vrot.slane %v1425, 4
    %v1427 = vadd.f32 %v1425, %v1426
    %v1428 = vrot.slane %v1427, 2
    %v1429 = vadd.f32 %v1427, %v1428
    %v1430 = vrot.slane %v1429, 1
    %v1431 = vadd.f32 %v1429, %v1430
    %s1432 = vtos %v1431
    %v1433 = vstv %s1432
    %vm1434 = vcmask 0
    %1435 = vst.msk [vmem:[#allocation2] sm:$0x1] %vm1434, %v1433
    // Predicated region
    $region10: #{tpu_custom_call.1} parent=1 // pred_check
      _
    $region11: #{tpu_custom_call.1} parent=1 // pred_check_branch
      %1437 = sbr.rel (0) target = $region13
    $region12: #{tpu_custom_call.1} parent=1 // pred_region
      %s1439 = ssub.s32 16, 16
      %1440 = vsyncadd [#allocation3], %s1439
      %s1442 = sshll.u32 [#allocation2], 4
      %s1443 = int_to_ptr.vmem [resolvable:$true] %s1442
      %1445 = dma.vmem_to_hbm [thread:$0]  %s1443, 16, %s2, [#allocation3]
    $region13: #{tpu_custom_call.1} parent=1 // pred_fallthru
      _
    // Predicated region
    $region14: #{tpu_custom_call.1} parent=1 // pred_check
      _
    $region15: #{tpu_custom_call.1} parent=1 // pred_check_branch
      %1447 = sbr.rel (0) target = $region17
    $region16: #{tpu_custom_call.1} parent=1 // pred_region
      %1448 = dma.done [#allocation3], 16
    $region17: #{tpu_custom_call.1} parent=1 // pred_fallthru
      _
    %1449 = vsyncpa [#allocation3], 1

</llo_original>
